<compile_context>
chip_gen: v7x
topology: tpu7x:2x2x1
jax: 0.10.0
libtpu: 0.0.40
codegen_flags: <defaults>
</compile_context>

<pallas_src>
import functools

import jax
import jax.numpy as jnp
from jax.experimental import pallas as pl
from jax.experimental.pallas import tpu as pltpu


def _round_up(x, m):
    return (x + m - 1) // m * m


# ----------------------------------------------------------------------------
# Pass 1: tiled matmul + per-channel sum / sum-of-squares accumulation
# ----------------------------------------------------------------------------
def _conv_stats_kernel(p_ref, w_ref, y_ref, stats_ref, *, m_valid, tm):
    i = pl.program_id(0)

    # bf16 x bf16 products are exact in f32; accumulate in f32 on the MXU.
    y = jnp.dot(p_ref[...], w_ref[...], preferred_element_type=jnp.float32)
    y_ref[...] = y                                             # pre-BN activation tile

    # Mask rows that are only M-padding so they do not pollute the batch stats.
    row = jax.lax.broadcasted_iota(jnp.int32, (tm, 1), 0) + i * tm
    y_m = jnp.where(row < m_valid, y, 0.0)

    @pl.when(i == 0)
    def _():
        stats_ref[...] = jnp.zeros_like(stats_ref)

    s0 = jnp.sum(y_m, axis=0, keepdims=True)                   # [1, C_pad]
    s1 = jnp.sum(y_m * y_m, axis=0, keepdims=True)             # [1, C_pad]
    stats_ref[...] = stats_ref[...] + jnp.concatenate([s0, s1], axis=0)


# ----------------------------------------------------------------------------
# Pass 2: normalize (batch stats) + affine + ReLU, tile by tile
# ----------------------------------------------------------------------------
def _bn_relu_kernel(y_ref, stats_ref, g_ref, b_ref, o_ref, *, m_valid, eps):
    inv_m = 1.0 / float(m_valid)
    mean = stats_ref[0:1, :] * inv_m                           # [1, C_pad]
    var = stats_ref[1:2, :] * inv_m - mean * mean
    var = jnp.maximum(var, 0.0)                                # guard f32 cancellation
    scale = g_ref[...] * jax.lax.rsqrt(var + eps)              # gamma folded into rsqrt
    shift = b_ref[...] - mean * scale
    o_ref[...] = jnp.maximum(y_ref[...] * scale + shift, 0.0).astype(o_ref.dtype)


# ----------------------------------------------------------------------------
# im2col (plain JAX, static unroll over the kernel window)
# ----------------------------------------------------------------------------
def _im2col(x, kh, kw, stride, padding, dilation):
    n, c, h, w = x.shape
    x_pad = jnp.pad(x, ((0, 0), (0, 0), (padding, padding), (padding, padding)))
    h_out = (h + 2 * padding - dilation * (kh - 1) - 1) // stride + 1
    w_out = (w + 2 * padding - dilation * (kw - 1) - 1) // stride + 1
    cols = []
    for i in range(kh):
        for j in range(kw):
            hs = i * dilation
            ws = j * dilation
            patch = x_pad[:, :,
                          hs:hs + (h_out - 1) * stride + 1:stride,
                          ws:ws + (w_out - 1) * stride + 1:stride]
            cols.append(patch)                                 # [N, C, Ho, Wo]
    patches = jnp.stack(cols, axis=2)                          # [N, C, KH*KW, Ho, Wo]
    patches = patches.transpose(0, 3, 4, 1, 2)                 # [N, Ho, Wo, C, KH*KW]
    patches = patches.reshape(n * h_out * w_out, c * kh * kw)  # K order = (c, kh, kw)
    return patches, h_out, w_out


# ----------------------------------------------------------------------------
# Wrapper: NCHW in -> NCHW out
# ----------------------------------------------------------------------------
def basic_conv(x, weight, gamma, beta, *, stride=1, padding=0, dilation=1,
               eps=1e-5, tm=256, compute_dtype=jnp.bfloat16):
    n, c_in, h, w = x.shape
    c_out, c_in_w, kh, kw = weight.shape
    assert c_in == c_in_w, "groups != 1 not supported"

    patches, h_out, w_out = _im2col(x, kh, kw, stride, padding, dilation)
    m, k = patches.shape

    # Padding: lane-dense output channels, sublane-friendly contraction dim, tiled M.
    c_pad = _round_up(c_out, 128)
    k_pad = _round_up(k, 16)
    tm = min(tm, _round_up(m, 8))
    m_pad = _round_up(m, tm)
    n_tiles = m_pad // tm

    patches_p = jnp.pad(patches, ((0, m_pad - m), (0, k_pad - k))).astype(compute_dtype)
    w2d = weight.reshape(c_out, k).T                           # [K, C_out]
    w2d = jnp.pad(w2d, ((0, k_pad - k), (0, c_pad - c_out))).astype(compute_dtype)
    g2d = jnp.pad(gamma.reshape(1, c_out).astype(jnp.float32),
                  ((0, 0), (0, c_pad - c_out)))
    b2d = jnp.pad(beta.reshape(1, c_out).astype(jnp.float32),
                  ((0, 0), (0, c_pad - c_out)))

    cparams = dict(vmem_limit_bytes=32 * 1024 * 1024)          # safe on v5e/v6e/v7x

    # ---- Pass 1: matmul tiles + accumulated per-channel sum / sumsq --------
    y, stats = pl.pallas_call(
        functools.partial(_conv_stats_kernel, m_valid=m, tm=tm),
        out_shape=(jax.ShapeDtypeStruct((m_pad, c_pad), jnp.float32),
                   jax.ShapeDtypeStruct((2, c_pad), jnp.float32)),
        grid=(n_tiles,),
        in_specs=[
            pl.BlockSpec((tm, k_pad), lambda i: (i, 0)),       # patches tile
            pl.BlockSpec((k_pad, c_pad), lambda i: (0, 0)),    # weight (resident)
        ],
        out_specs=(
            pl.BlockSpec((tm, c_pad), lambda i: (i, 0)),       # pre-BN activation
            pl.BlockSpec((2, c_pad), lambda i: (0, 0)),        # resident stats accumulator
        ),
        compiler_params=pltpu.CompilerParams(
            dimension_semantics=("arbitrary",), **cparams),
    )(patches_p, w2d)

    # ---- Pass 2: normalize + affine + ReLU ---------------------------------
    out2d = pl.pallas_call(
        functools.partial(_bn_relu_kernel, m_valid=m, eps=eps),
        out_shape=jax.ShapeDtypeStruct((m_pad, c_pad), x.dtype),
        grid=(n_tiles,),
        in_specs=[
            pl.BlockSpec((tm, c_pad), lambda i: (i, 0)),       # y tile
            pl.BlockSpec((2, c_pad), lambda i: (0, 0)),        # stats (resident)
            pl.BlockSpec((1, c_pad), lambda i: (0, 0)),        # gamma
            pl.BlockSpec((1, c_pad), lambda i: (0, 0)),        # beta
        ],
        out_specs=pl.BlockSpec((tm, c_pad), lambda i: (i, 0)),
        compiler_params=pltpu.CompilerParams(
            dimension_semantics=("parallel",), **cparams),
    )(y, stats, g2d, b2d)

    # [M_pad, C_pad] -> valid [M, C_out] -> NHWC -> NCHW (layout plumbing only).
    out = out2d[:m, :c_out].reshape(n, h_out, w_out, c_out).transpose(0, 3, 1, 2)
    return out


# ----------------------------------------------------------------------------
# Deterministic parameter init (mirrors the PyTorch __init__ shapes)
# ----------------------------------------------------------------------------
def init_params(key, in_planes, out_planes, kernel_size):
    kh = kw = kernel_size
    k_w, k_b = jax.random.split(key)
    fan_in = in_planes * kh * kw
    fan_out = out_planes * kh * kw
    # xavier_normal_ on conv weight
    std = (2.0 / (fan_in + fan_out)) ** 0.5
    weight = std * jax.random.normal(k_w, (out_planes, in_planes, kh, kw), jnp.float32)
    # nn.Conv2d default bias init (present in the module, cancels under train-mode BN)
    bound = 1.0 / (fan_in ** 0.5)
    bias = jax.random.uniform(k_b, (out_planes,), jnp.float32, -bound, bound)
    # BatchNorm2d affine params
    gamma = jnp.ones((out_planes,), jnp.float32)
    beta = jnp.zeros((out_planes,), jnp.float32)
    return weight, bias, gamma, beta


if __name__ == "__main__":
    key = jax.random.PRNGKey(0)
    k_x, k_p = jax.random.split(key)

    # Small shapes consistent with the module's forward (NCHW input).
    N, C_IN, H, W = 2, 4, 16, 16
    C_OUT, K_SIZE, STRIDE, PAD = 8, 3, 1, 1

    x = jax.random.normal(k_x, (N, C_IN, H, W), jnp.float32)
    weight, bias, gamma, beta = init_params(k_p, C_IN, C_OUT, K_SIZE)

    fwd = jax.jit(functools.partial(basic_conv, stride=STRIDE, padding=PAD, dilation=1))
    out = fwd(x, weight, gamma, beta)
    out = jax.block_until_ready(out)

    # Reference: conv (bf16 inputs, f32 accumulation, matching the kernel's compute
    # dtype) + conv bias + train-mode BN + ReLU.  The conv bias is included here but
    # omitted in the kernel -- it cancels exactly under batch-stat mean subtraction.
    ref = jax.lax.conv_general_dilated(
        x.astype(jnp.bfloat16), weight.astype(jnp.bfloat16),
        window_strides=(STRIDE, STRIDE),
        padding=[(PAD, PAD), (PAD, PAD)],
        dimension_numbers=("NCHW", "OIHW", "NCHW"),
        preferred_element_type=jnp.float32) + bias.reshape(1, -1, 1, 1)
    mu = ref.mean(axis=(0, 2, 3), keepdims=True)
    var = ((ref - mu) ** 2).mean(axis=(0, 2, 3), keepdims=True)
    ref = (ref - mu) / jnp.sqrt(var + 1e-5)
    ref = ref * gamma.reshape(1, -1, 1, 1) + beta.reshape(1, -1, 1, 1)
    ref = jnp.maximum(ref, 0.0)

    assert out.shape == (N, C_OUT, H, W), out.shape
    assert jnp.allclose(out, ref, atol=5e-3, rtol=5e-3), \
        float(jnp.max(jnp.abs(out - ref)))

    print("KERNEL_OK")
</pallas_src>

<mosaic_0001>
module attributes {stable_mosaic.version = 11 : i64} {
  func.func @_conv_stats_kernel(%arg0: i32, %arg1: memref<256x48xbf16, #tpu.memory_space<vmem>>, %arg2: memref<48x128xbf16, #tpu.memory_space<vmem>>, %arg3: memref<256x128xf32, #tpu.memory_space<vmem>>, %arg4: memref<2x128xf32, #tpu.memory_space<vmem>>) attributes {dimension_semantics = [#tpu.dimension_semantics<arbitrary>], iteration_bounds = array<i64: 2>, scalar_prefetch = 0 : i64, scratch_operands = 0 : i64, tpu.core_type = #tpu.core_type<tc>, window_params = [{transform_indices = @transform_0, window_bounds = array<i64: 256, 48>}, {pipeline_mode = #tpu.pipeline_mode<synchronous>, transform_indices = @transform_1, window_bounds = array<i64: 48, 128>}, {transform_indices = @transform_2, window_bounds = array<i64: 256, 128>}, {pipeline_mode = #tpu.pipeline_mode<synchronous>, transform_indices = @transform_3, window_bounds = array<i64: 2, 128>}]} {
    %c0 = arith.constant 0 : index
    %c0_0 = arith.constant 0 : index
    %0 = vector.load %arg1[%c0, %c0_0] : memref<256x48xbf16, #tpu.memory_space<vmem>>, vector<256x48xbf16>
    %c0_1 = arith.constant 0 : index
    %c0_2 = arith.constant 0 : index
    %1 = vector.load %arg2[%c0_1, %c0_2] : memref<48x128xbf16, #tpu.memory_space<vmem>>, vector<48x128xbf16>
    %cst = arith.constant dense<0.000000e+00> : vector<256x128xf32>
    %2 = tpu.matmul %0, %1, %cst {dimension_numbers = #tpu.dot_dimension_numbers<[1], [0], [0], [1], [0, 0, 1, 1], [], []>} : vector<256x48xbf16>, vector<48x128xbf16>, vector<256x128xf32> -> vector<256x128xf32>
    %c0_3 = arith.constant 0 : index
    %c0_4 = arith.constant 0 : index
    %3 = vector.load %arg3[%c0_3, %c0_4] : memref<256x128xf32, #tpu.memory_space<vmem>>, vector<256x128xf32>
    tpu.vector_store %arg3[%c0_3, %c0_4], %2 {strides = array<i32>} : memref<256x128xf32, #tpu.memory_space<vmem>>, vector<256x128xf32>,
    %4 = tpu.iota {dimensions = array<i32: 0>} : vector<256x1xi32>
    %c256_i32 = arith.constant 256 : i32
    %5 = arith.muli %arg0, %c256_i32 : i32
    %6 = vector.broadcast %5 : i32 to vector<256x1xi32>
    %7 = arith.addi %4, %6 : vector<256x1xi32>
    %c512_i32 = arith.constant 512 : i32
    %8 = vector.broadcast %c512_i32 : i32 to vector<256x1xi32>
    %9 = arith.cmpi slt, %7, %8 : vector<256x1xi32>
    %cst_5 = arith.constant 0.000000e+00 : f32
    %10 = vector.shape_cast %9 : vector<256x1xi1> to vector<256x1xi1>
    %11 = vector.broadcast %10 : vector<256x1xi1> to vector<256x128xi1>
    %12 = vector.broadcast %cst_5 : f32 to vector<256x128xf32>
    %13 = arith.select %11, %2, %12 : vector<256x128xi1>, vector<256x128xf32>
    %c0_i32 = arith.constant 0 : i32
    %14 = arith.cmpi eq, %arg0, %c0_i32 : i32
    %15 = arith.extui %14 : i1 to i32
    %c0_i32_6 = arith.constant 0 : i32
    %16 = arith.cmpi ne, %15, %c0_i32_6 : i32
    scf.if %16 {
      %cst_13 = arith.constant 0.000000e+00 : f32
      %26 = vector.broadcast %cst_13 : f32 to vector<2x128xf32>
      %c0_14 = arith.constant 0 : index
      %c0_15 = arith.constant 0 : index
      %27 = vector.load %arg4[%c0_14, %c0_15] : memref<2x128xf32, #tpu.memory_space<vmem>>, vector<2x128xf32>
      tpu.vector_store %arg4[%c0_14, %c0_15], %26 {strides = array<i32>} : memref<2x128xf32, #tpu.memory_space<vmem>>, vector<2x128xf32>,
    } else {
    }
    %cst_7 = arith.constant dense<0.000000e+00> : vector<128xf32>
    %17 = vector.multi_reduction <add>, %13, %cst_7 [0] : vector<256x128xf32> to vector<128xf32>
    %18 = vector.shape_cast %17 : vector<128xf32> to vector<1x128xf32>
    %19 = arith.mulf %13, %13 : vector<256x128xf32>
    %cst_8 = arith.constant dense<0.000000e+00> : vector<128xf32>
    %20 = vector.multi_reduction <add>, %19, %cst_8 [0] : vector<256x128xf32> to vector<128xf32>
    %21 = vector.shape_cast %20 : vector<128xf32> to vector<1x128xf32>
    %c0_9 = arith.constant 0 : index
    %c0_10 = arith.constant 0 : index
    %22 = vector.load %arg4[%c0_9, %c0_10] : memref<2x128xf32, #tpu.memory_space<vmem>>, vector<2x128xf32>
    %23 = tpu.concatenate %18, %21 in 0 : vector<1x128xf32>, vector<1x128xf32> -> vector<2x128xf32>
    %24 = arith.addf %22, %23 : vector<2x128xf32>
    %c0_11 = arith.constant 0 : index
    %c0_12 = arith.constant 0 : index
    %25 = vector.load %arg4[%c0_11, %c0_12] : memref<2x128xf32, #tpu.memory_space<vmem>>, vector<2x128xf32>
    tpu.vector_store %arg4[%c0_11, %c0_12], %24 {strides = array<i32>} : memref<2x128xf32, #tpu.memory_space<vmem>>, vector<2x128xf32>,
    return
  }
  func.func @transform_0(%arg0: i32) -> (i32, i32) {
    %c0_i32 = arith.constant 0 : i32
    %c0_i32_0 = arith.constant 0 : i32
    return %arg0, %c0_i32 : i32, i32
  }
  func.func @transform_1(%arg0: i32) -> (i32, i32) {
    %c0_i32 = arith.constant 0 : i32
    %c0_i32_0 = arith.constant 0 : i32
    %c0_i32_1 = arith.constant 0 : i32
    return %c0_i32, %c0_i32_0 : i32, i32
  }
  func.func @transform_2(%arg0: i32) -> (i32, i32) {
    %c0_i32 = arith.constant 0 : i32
    %c0_i32_0 = arith.constant 0 : i32
    return %arg0, %c0_i32 : i32, i32
  }
  func.func @transform_3(%arg0: i32) -> (i32, i32) {
    %c0_i32 = arith.constant 0 : i32
    %c0_i32_0 = arith.constant 0 : i32
    %c0_i32_1 = arith.constant 0 : i32
    return %c0_i32, %c0_i32_0 : i32, i32
  }
}

module attributes {stable_mosaic.version = 11 : i64} {
  func.func @_bn_relu_kernel(%arg0: i32, %arg1: memref<256x128xf32, #tpu.memory_space<vmem>>, %arg2: memref<2x128xf32, #tpu.memory_space<vmem>>, %arg3: memref<1x128xf32, #tpu.memory_space<vmem>>, %arg4: memref<1x128xf32, #tpu.memory_space<vmem>>, %arg5: memref<256x128xf32, #tpu.memory_space<vmem>>) attributes {dimension_semantics = [#tpu.dimension_semantics<parallel>], iteration_bounds = array<i64: 2>, scalar_prefetch = 0 : i64, scratch_operands = 0 : i64, tpu.core_type = #tpu.core_type<tc>, window_params = [{transform_indices = @transform_0, window_bounds = array<i64: 256, 128>}, {pipeline_mode = #tpu.pipeline_mode<synchronous>, transform_indices = @transform_1, window_bounds = array<i64: 2, 128>}, {pipeline_mode = #tpu.pipeline_mode<synchronous>, transform_indices = @transform_2, window_bounds = array<i64: 1, 128>}, {pipeline_mode = #tpu.pipeline_mode<synchronous>, transform_indices = @transform_3, window_bounds = array<i64: 1, 128>}, {transform_indices = @transform_4, window_bounds = array<i64: 256, 128>}]} {
    %c0 = arith.constant 0 : index
    %c0_0 = arith.constant 0 : index
    %0 = vector.load %arg2[%c0, %c0_0] : memref<2x128xf32, #tpu.memory_space<vmem>>, vector<1x128xf32>
    %cst = arith.constant 0.001953125 : f32
    %1 = vector.broadcast %cst : f32 to vector<1x128xf32>
    %2 = arith.mulf %0, %1 : vector<1x128xf32>
    %c1 = arith.constant 1 : index
    %c0_1 = arith.constant 0 : index
    %3 = vector.load %arg2[%c1, %c0_1] : memref<2x128xf32, #tpu.memory_space<vmem>>, vector<1x128xf32>
    %cst_2 = arith.constant 0.001953125 : f32
    %4 = vector.broadcast %cst_2 : f32 to vector<1x128xf32>
    %5 = arith.mulf %3, %4 : vector<1x128xf32>
    %6 = arith.mulf %2, %2 : vector<1x128xf32>
    %7 = arith.subf %5, %6 : vector<1x128xf32>
    %cst_3 = arith.constant 0.000000e+00 : f32
    %8 = vector.broadcast %cst_3 : f32 to vector<1x128xf32>
    %9 = arith.maximumf %7, %8 : vector<1x128xf32>
    %c0_4 = arith.constant 0 : index
    %c0_5 = arith.constant 0 : index
    %10 = vector.load %arg3[%c0_4, %c0_5] : memref<1x128xf32, #tpu.memory_space<vmem>>, vector<1x128xf32>
    %cst_6 = arith.constant 9.99999974E-6 : f32
    %11 = vector.broadcast %cst_6 : f32 to vector<1x128xf32>
    %12 = arith.addf %9, %11 : vector<1x128xf32>
    %13 = math.rsqrt %12 : vector<1x128xf32>
    %14 = arith.mulf %10, %13 : vector<1x128xf32>
    %c0_7 = arith.constant 0 : index
    %c0_8 = arith.constant 0 : index
    %15 = vector.load %arg4[%c0_7, %c0_8] : memref<1x128xf32, #tpu.memory_space<vmem>>, vector<1x128xf32>
    %16 = arith.mulf %2, %14 : vector<1x128xf32>
    %17 = arith.subf %15, %16 : vector<1x128xf32>
    %c0_9 = arith.constant 0 : index
    %c0_10 = arith.constant 0 : index
    %18 = vector.load %arg1[%c0_9, %c0_10] : memref<256x128xf32, #tpu.memory_space<vmem>>, vector<256x128xf32>
    %19 = vector.broadcast %14 : vector<1x128xf32> to vector<256x128xf32>
    %20 = arith.mulf %18, %19 : vector<256x128xf32>
    %21 = vector.broadcast %17 : vector<1x128xf32> to vector<256x128xf32>
    %22 = arith.addf %20, %21 : vector<256x128xf32>
    %cst_11 = arith.constant 0.000000e+00 : f32
    %23 = vector.broadcast %cst_11 : f32 to vector<256x128xf32>
    %24 = arith.maximumf %22, %23 : vector<256x128xf32>
    %c0_12 = arith.constant 0 : index
    %c0_13 = arith.constant 0 : index
    %25 = vector.load %arg5[%c0_12, %c0_13] : memref<256x128xf32, #tpu.memory_space<vmem>>, vector<256x128xf32>
    tpu.vector_store %arg5[%c0_12, %c0_13], %24 {strides = array<i32>} : memref<256x128xf32, #tpu.memory_space<vmem>>, vector<256x128xf32>,
    return
  }
  func.func @transform_0(%arg0: i32) -> (i32, i32) {
    %c0_i32 = arith.constant 0 : i32
    %c0_i32_0 = arith.constant 0 : i32
    return %arg0, %c0_i32 : i32, i32
  }
  func.func @transform_1(%arg0: i32) -> (i32, i32) {
    %c0_i32 = arith.constant 0 : i32
    %c0_i32_0 = arith.constant 0 : i32
    %c0_i32_1 = arith.constant 0 : i32
    return %c0_i32, %c0_i32_0 : i32, i32
  }
  func.func @transform_2(%arg0: i32) -> (i32, i32) {
    %c0_i32 = arith.constant 0 : i32
    %c0_i32_0 = arith.constant 0 : i32
    %c0_i32_1 = arith.constant 0 : i32
    return %c0_i32, %c0_i32_0 : i32, i32
  }
  func.func @transform_3(%arg0: i32) -> (i32, i32) {
    %c0_i32 = arith.constant 0 : i32
    %c0_i32_0 = arith.constant 0 : i32
    %c0_i32_1 = arith.constant 0 : i32
    return %c0_i32, %c0_i32_0 : i32, i32
  }
  func.func @transform_4(%arg0: i32) -> (i32, i32) {
    %c0_i32 = arith.constant 0 : i32
    %c0_i32_0 = arith.constant 0 : i32
    return %arg0, %c0_i32 : i32, i32
  }
}

</mosaic_0001>

<llo_original>
// kernel: basic_conv.3
$region0: #{basic_conv.3}
  #allocation0 [shape = 'u32[]', space=smem, size = 0x4, offset = 0x4, fixed_abs, tag = 'smem constant byte address 0x4 - core index']
  #allocation1 [shape = 'u32[144,128]{1,0:T(1,128)}', space=vmem, size = 0x12000, scoped, tag = 'internal scratch']
  %s0 = inlined_call_operand.vmem [shape: f32[512,128], index: 0, kind: input, shape index: {}]
  %s1 = inlined_call_operand.vmem [shape: f32[2,128], index: 1, kind: input, shape index: {}]
  %s2 = inlined_call_operand.vmem [shape: f32[1,128], index: 2, kind: input, shape index: {}]
  %s3 = inlined_call_operand.vmem [shape: f32[1,128], index: 3, kind: input, shape index: {}]
  %s4 = inlined_call_operand.vmem [shape: f32[512,128], index: 4, kind: output, shape index: {}]
  %s5 = sld [smem:[#allocation0]]
  $region49: #{basic_conv.3} parent=0
    _
  %s7 = ssub.s32 1, %s5
  %s8 = scalar_select 0, %s7, %s5
  loop: start=0, step=1, limit=4
  $region2: #{basic_conv.3} parent=0 // loop_pre_header
    _
  $region3: #{basic_conv.3} parent=0 // loop_header
    %s10 = sphi 0, %s14
    %p11 = scmp.ge.s32.totalorder %s10, 4
    %s20 = sphi 0, %s22
    %s23 = sphi 0, %s20
    %s24 = sphi 0, %s23
    %s40 = sphi 0, %s24
    %s44 = sphi 0, %s44
    %s46 = sphi 0, %s44
    %s47 = sphi 0, %s46
    %s61 = sphi 0, %s47
    %s65 = sphi 0, %s65
    %s67 = sphi 0, %s65
    %s68 = sphi 0, %s67
    %s82 = sphi 0, %s68
    %s86 = sphi 0, %s86
    %s88 = sphi 0, %s86
    %s89 = sphi 0, %s88
    %s103 = sphi 0, %s89
    %s109 = sphi 0, %s111
    %s112 = sphi 0, %s109
    %s113 = sphi 0, %s112
    %s129 = sphi 0, %s113
  $region4: #{basic_conv.3} parent=0 // loop_header_branch
    %13 = sbr.rel (%p11) target = $region8
  $region5: #{basic_conv.3} parent=0 // loop_body
    %s15 = ssub.s32 %s10, 1
    %s16 = ssub.s32 %s10, 2
    %s17 = sadd.s32 %s10, 1
    %s18 = ssub.s32 %s10, %s17
    %p19 = scmp.eq.s32.totalorder %s18, 0
    %s21 = sadd.s32 %s20, 1
    %s22 = scalar_select %p19, %s20, %s21
    %p25 = pneg %p19
    %p26 = scmp.eq.s32.totalorder %s10, 1
    %p27 = por %p25, %p26
    %p28 = scmp.ne.s32.totalorder %s20, %s23
    %p29 = scmp.eq.s32.totalorder %s10, 0
    %p30 = por %p28, %p29
    %p31 = scmp.ne.s32.totalorder %s20, %s23
    %p32 = scmp.eq.s32.totalorder %s15, 1
    %p33 = por %p31, %p32
    %p34 = scmp.ne.s32.totalorder %s23, %s24
    %p35 = scmp.eq.s32.totalorder %s15, 0
    %p36 = por %p34, %p35
    %p37 = scmp.ne.s32.totalorder %s23, %s24
    %p38 = scmp.eq.s32.totalorder %s16, 1
    %p39 = por %p37, %p38
    %p41 = scmp.ne.s32.totalorder %s24, %s40
    %p42 = scmp.eq.s32.totalorder %s16, 0
    %p43 = por %p41, %p42
    %s45 = sadd.s32 %s44, 1
    %p48 = scmp.eq.s32.totalorder %s10, 1
    %p49 = scmp.ne.s32.totalorder %s44, %s46
    %p50 = scmp.eq.s32.totalorder %s10, 0
    %p51 = por %p49, %p50
    %p52 = scmp.ne.s32.totalorder %s44, %s46
    %p53 = scmp.eq.s32.totalorder %s15, 1
    %p54 = por %p52, %p53
    %p55 = scmp.ne.s32.totalorder %s46, %s47
    %p56 = scmp.eq.s32.totalorder %s15, 0
    %p57 = por %p55, %p56
    %p58 = scmp.ne.s32.totalorder %s46, %s47
    %p59 = scmp.eq.s32.totalorder %s16, 1
    %p60 = por %p58, %p59
    %p62 = scmp.ne.s32.totalorder %s47, %s61
    %p63 = scmp.eq.s32.totalorder %s16, 0
    %p64 = por %p62, %p63
    %s66 = sadd.s32 %s65, 1
    %p69 = scmp.eq.s32.totalorder %s10, 1
    %p70 = scmp.ne.s32.totalorder %s65, %s67
    %p71 = scmp.eq.s32.totalorder %s10, 0
    %p72 = por %p70, %p71
    %p73 = scmp.ne.s32.totalorder %s65, %s67
    %p74 = scmp.eq.s32.totalorder %s15, 1
    %p75 = por %p73, %p74
    %p76 = scmp.ne.s32.totalorder %s67, %s68
    %p77 = scmp.eq.s32.totalorder %s15, 0
    %p78 = por %p76, %p77
    %p79 = scmp.ne.s32.totalorder %s67, %s68
    %p80 = scmp.eq.s32.totalorder %s16, 1
    %p81 = por %p79, %p80
    %p83 = scmp.ne.s32.totalorder %s68, %s82
    %p84 = scmp.eq.s32.totalorder %s16, 0
    %p85 = por %p83, %p84
    %s87 = sadd.s32 %s86, 1
    %p90 = scmp.eq.s32.totalorder %s10, 1
    %p91 = scmp.ne.s32.totalorder %s86, %s88
    %p92 = scmp.eq.s32.totalorder %s10, 0
    %p93 = por %p91, %p92
    %p94 = scmp.ne.s32.totalorder %s86, %s88
    %p95 = scmp.eq.s32.totalorder %s15, 1
    %p96 = por %p94, %p95
    %p97 = scmp.ne.s32.totalorder %s88, %s89
    %p98 = scmp.eq.s32.totalorder %s15, 0
    %p99 = por %p97, %p98
    %p100 = scmp.ne.s32.totalorder %s88, %s89
    %p101 = scmp.eq.s32.totalorder %s16, 1
    %p102 = por %p100, %p101
    %p104 = scmp.ne.s32.totalorder %s89, %s103
    %p105 = scmp.eq.s32.totalorder %s16, 0
    %p106 = por %p104, %p105
    %s107 = ssub.s32 %s10, %s17
    %p108 = scmp.eq.s32.totalorder %s107, 0
    %s110 = sadd.s32 %s109, 1
    %s111 = scalar_select %p108, %s109, %s110
    %p114 = pneg %p108
    %p115 = scmp.eq.s32.totalorder %s10, 1
    %p116 = por %p114, %p115
    %p117 = scmp.ne.s32.totalorder %s109, %s112
    %p118 = scmp.eq.s32.totalorder %s10, 0
    %p119 = por %p117, %p118
    %p120 = scmp.ne.s32.totalorder %s109, %s112
    %p121 = scmp.eq.s32.totalorder %s15, 1
    %p122 = por %p120, %p121
    %p123 = scmp.ne.s32.totalorder %s112, %s113
    %p124 = scmp.eq.s32.totalorder %s15, 0
    %p125 = por %p123, %p124
    %p126 = scmp.ne.s32.totalorder %s112, %s113
    %p127 = scmp.eq.s32.totalorder %s16, 1
    %p128 = por %p126, %p127
    %p130 = scmp.ne.s32.totalorder %s113, %s129
    %p131 = scmp.eq.s32.totalorder %s16, 0
    %p132 = por %p130, %p131
    %p133 = scmp.le.s32.totalorder 1, %s10
    %p134 = scmp.lt.s32.totalorder %s10, 3
    %p135 = pnand %p133, %p134
    %p136 = pneg %p135
    // Predicated region
    $region9: #{basic_conv.3} parent=5 // pred_check
      _
    $region10: #{basic_conv.3} parent=5 // pred_check_branch
      %138 = sbr.rel (%p135) target = $region12
    $region11: #{basic_conv.3} parent=5 // pred_region
      %s139 = ssub.s32 %s10, 1
      // Predicated region
      $region13: #{basic_conv.3} parent=11 // pred_check
        %p140 = pneg %p57
      $region14: #{basic_conv.3} parent=11 // pred_check_branch
        %142 = sbr.rel (%p140) target = $region16
      $region15: #{basic_conv.3} parent=11 // pred_region
        _
      $region16: #{basic_conv.3} parent=11 // pred_fallthru
        _
      // Predicated region
      $region17: #{basic_conv.3} parent=11 // pred_check
        %p143 = pneg %p78
      $region18: #{basic_conv.3} parent=11 // pred_check_branch
        %145 = sbr.rel (%p143) target = $region20
      $region19: #{basic_conv.3} parent=11 // pred_region
        _
      $region20: #{basic_conv.3} parent=11 // pred_fallthru
        _
      // Predicated region
      $region21: #{basic_conv.3} parent=11 // pred_check
        %p146 = pneg %p99
      $region22: #{basic_conv.3} parent=11 // pred_check_branch
        %148 = sbr.rel (%p146) target = $region24
      $region23: #{basic_conv.3} parent=11 // pred_region
        _
      $region24: #{basic_conv.3} parent=11 // pred_fallthru
        _
    $region12: #{basic_conv.3} parent=5 // pred_fallthru
      _
    %p149 = scmp.lt.s32.totalorder %s10, 2
    // Predicated region
    $region25: #{basic_conv.3} parent=5 // pred_check
      %p150 = pneg %p149
    $region26: #{basic_conv.3} parent=5 // pred_check_branch
      %152 = sbr.rel (%p150) target = $region28
    $region27: #{basic_conv.3} parent=5 // pred_region
      // Predicated region
      $region29: #{basic_conv.3} parent=27 // pred_check
        %p153 = pneg %p30
      $region30: #{basic_conv.3} parent=27 // pred_check_branch
        %155 = sbr.rel (%p153) target = $region32
      $region31: #{basic_conv.3} parent=27 // pred_region
        %s156 = smul.u32 32, %s10
        %p157 = scmp.lt.s32.totalorder %s156, 63
        %s158 = scalar_select %p157, %s156, 63
        %s159 = smul.addr %s158, 8
        %s160 = scalar_lea.vmem %s0, %s159
        %s161 = smul.u32 32, %s10
      $region32: #{basic_conv.3} parent=27 // pred_fallthru
        _
    $region28: #{basic_conv.3} parent=5 // pred_fallthru
      _
    %p162 = scmp.le.s32.totalorder 1, %s10
    %p163 = scmp.lt.s32.totalorder %s10, 3
    %p164 = pnand %p162, %p163
    %p165 = pneg %p164
    // Predicated region
    $region33: #{basic_conv.3} parent=5 // pred_check
      _
    $region34: #{basic_conv.3} parent=5 // pred_check_branch
      %167 = sbr.rel (%p164) target = $region36
    $region35: #{basic_conv.3} parent=5 // pred_region
      %s168 = ssub.s32 %s10, 1
      %s169 = smul.u32 32, %s15
      %p170 = scmp.lt.s32.totalorder %s169, 63
      %s171 = scalar_select %p170, %s169, 63
      %s172 = smul.addr %s171, 8
      %s173 = scalar_lea.vmem %s0, %s172
      %p174 = pneg %p36
      %p175 = pneg %p33
      %p176 = pneg %p57
      %p177 = pneg %p54
      %p178 = pneg %p78
      %p179 = pneg %p75
      %p180 = pneg %p99
      %p181 = pneg %p96
      %p182 = pneg %p125
      %p183 = pneg %p122
      %s184 = smul.u32 32, %s15
      %p185 = scmp.lt.s32.totalorder %s184, 63
      %s186 = scalar_select %p185, %s184, 63
      %s187 = smul.addr %s186, 8
      %s188 = scalar_lea.vmem %s4, %s187
      %s189 = smul.u32 32, %s15
      %p190 = scmp.lt.s32.totalorder %s189, 63
      %s191 = scalar_select %p190, %s189, 63
      %s192 = smul.addr %s191, 8
      %s193 = scalar_lea.vmem %s0, %s192
      %s194 = smul.u32 32, %s15
      %s195 = smul.u32 32, %s15
      %p196 = scmp.lt.s32.totalorder %s195, 63
      %s197 = scalar_select %p196, %s195, 63
      %s198 = smul.addr %s197, 8
      %s199 = scalar_lea.vmem %s4, %s198
      %s200 = smul.u32 32, %s15
      %v201 = vld [vmem:[%s1] sm:$0x1]
      %v202 = vmul.f32 %v201, 0.001953125
      %v203 = vld [vmem:[%s1 + $0x1] sm:$0x1]
      %v204 = vmul.f32 %v203, 0.001953125
      %v205 = vmul.f32 %v202, %v202
      %v206 = vsub.f32 %v204, %v205
      %v207 = vmax.f32 %v206, 0.0
      %v208 = vld [vmem:[%s2] sm:$0x1]
      %v209 = vadd.f32 %v207, 1e-05
      %v210 = vrsqrt.pop %v209
      %v211 = vmul.f32 %v208, %v210
      %v212 = vld [vmem:[%s3] sm:$0x1]
      %v213 = vmul.f32 %v202, %v211
      %v214 = vsub.f32 %v212, %v213
      %v215 = vld [vmem:[%s193] sm:$0xff]
      %v216 = vld [vmem:[%s193 + $0x8] sm:$0xff]
      %v217 = vld [vmem:[%s193 + $0x10] sm:$0xff]
      %v218 = vld [vmem:[%s193 + $0x18] sm:$0xff]
      %v219 = vld [vmem:[%s193 + $0x20] sm:$0xff]
      %v220 = vld [vmem:[%s193 + $0x28] sm:$0xff]
      %v221 = vld [vmem:[%s193 + $0x30] sm:$0xff]
      %v222 = vld [vmem:[%s193 + $0x38] sm:$0xff]
      %v223 = vld [vmem:[%s193 + $0x40] sm:$0xff]
      %v224 = vld [vmem:[%s193 + $0x48] sm:$0xff]
      %v225 = vld [vmem:[%s193 + $0x50] sm:$0xff]
      %v226 = vld [vmem:[%s193 + $0x58] sm:$0xff]
      %v227 = vld [vmem:[%s193 + $0x60] sm:$0xff]
      %v228 = vld [vmem:[%s193 + $0x68] sm:$0xff]
      %v229 = vld [vmem:[%s193 + $0x70] sm:$0xff]
      %v230 = vld [vmem:[%s193 + $0x78] sm:$0xff]
      %v231 = vld [vmem:[%s193 + $0x80] sm:$0xff]
      %v232 = vld [vmem:[%s193 + $0x88] sm:$0xff]
      %v233 = vld [vmem:[%s193 + $0x90] sm:$0xff]
      %v234 = vld [vmem:[%s193 + $0x98] sm:$0xff]
      %v235 = vld [vmem:[%s193 + $0xa0] sm:$0xff]
      %v236 = vld [vmem:[%s193 + $0xa8] sm:$0xff]
      %v237 = vld [vmem:[%s193 + $0xb0] sm:$0xff]
      %v238 = vld [vmem:[%s193 + $0xb8] sm:$0xff]
      %v239 = vld [vmem:[%s193 + $0xc0] sm:$0xff]
      %v240 = vld [vmem:[%s193 + $0xc8] sm:$0xff]
      %v241 = vld [vmem:[%s193 + $0xd0] sm:$0xff]
      %v242 = vld [vmem:[%s193 + $0xd8] sm:$0xff]
      %v243 = vld [vmem:[%s193 + $0xe0] sm:$0xff]
      %v244 = vld [vmem:[%s193 + $0xe8] sm:$0xff]
      %v245 = vld [vmem:[%s193 + $0xf0] sm:$0xff]
      %v246 = vld [vmem:[%s193 + $0xf8] sm:$0xff]
      %v248 = vlaneseq
      %v249 = vshrl.u32 %v248, 7
      %v250 = vsub.s32 0, %v249
      %v251 = vrot.slane %v211, %v250
      %v253 = vmul.f32 %v215, %v251
      %v254 = vmul.f32 %v216, %v251
      %v255 = vmul.f32 %v217, %v251
      %v256 = vmul.f32 %v218, %v251
      %v257 = vmul.f32 %v219, %v251
      %v258 = vmul.f32 %v220, %v251
      %v259 = vmul.f32 %v221, %v251
      %v260 = vmul.f32 %v222, %v251
      %v261 = vmul.f32 %v223, %v251
      %v262 = vmul.f32 %v224, %v251
      %v263 = vmul.f32 %v225, %v251
      %v264 = vmul.f32 %v226, %v251
      %v265 = vmul.f32 %v227, %v251
      %v266 = vmul.f32 %v228, %v251
      %v267 = vmul.f32 %v229, %v251
      %v268 = vmul.f32 %v230, %v251
      %v269 = vmul.f32 %v231, %v251
      %v270 = vmul.f32 %v232, %v251
      %v271 = vmul.f32 %v233, %v251
      %v272 = vmul.f32 %v234, %v251
      %v273 = vmul.f32 %v235, %v251
      %v274 = vmul.f32 %v236, %v251
      %v275 = vmul.f32 %v237, %v251
      %v276 = vmul.f32 %v238, %v251
      %v277 = vmul.f32 %v239, %v251
      %v278 = vmul.f32 %v240, %v251
      %v279 = vmul.f32 %v241, %v251
      %v280 = vmul.f32 %v242, %v251
      %v281 = vmul.f32 %v243, %v251
      %v282 = vmul.f32 %v244, %v251
      %v283 = vmul.f32 %v245, %v251
      %v284 = vmul.f32 %v246, %v251
      %v286 = vlaneseq
      %v287 = vshrl.u32 %v286, 7
      %v288 = vsub.s32 0, %v287
      %v289 = vrot.slane %v214, %v288
      %v291 = vadd.f32 %v253, %v289
      %v292 = vadd.f32 %v254, %v289
      %v293 = vadd.f32 %v255, %v289
      %v294 = vadd.f32 %v256, %v289
      %v295 = vadd.f32 %v257, %v289
      %v296 = vadd.f32 %v258, %v289
      %v297 = vadd.f32 %v259, %v289
      %v298 = vadd.f32 %v260, %v289
      %v299 = vadd.f32 %v261, %v289
      %v300 = vadd.f32 %v262, %v289
      %v301 = vadd.f32 %v263, %v289
      %v302 = vadd.f32 %v264, %v289
      %v303 = vadd.f32 %v265, %v289
      %v304 = vadd.f32 %v266, %v289
      %v305 = vadd.f32 %v267, %v289
      %v306 = vadd.f32 %v268, %v289
      %v307 = vadd.f32 %v269, %v289
      %v308 = vadd.f32 %v270, %v289
      %v309 = vadd.f32 %v271, %v289
      %v310 = vadd.f32 %v272, %v289
      %v311 = vadd.f32 %v273, %v289
      %v312 = vadd.f32 %v274, %v289
      %v313 = vadd.f32 %v275, %v289
      %v314 = vadd.f32 %v276, %v289
      %v315 = vadd.f32 %v277, %v289
      %v316 = vadd.f32 %v278, %v289
      %v317 = vadd.f32 %v279, %v289
      %v318 = vadd.f32 %v280, %v289
      %v319 = vadd.f32 %v281, %v289
      %v320 = vadd.f32 %v282, %v289
      %v321 = vadd.f32 %v283, %v289
      %v322 = vadd.f32 %v284, %v289
      %v323 = vmax.f32 %v291, 0.0
      %v324 = vmax.f32 %v292, 0.0
      %v325 = vmax.f32 %v293, 0.0
      %v326 = vmax.f32 %v294, 0.0
      %v327 = vmax.f32 %v295, 0.0
      %v328 = vmax.f32 %v296, 0.0
      %v329 = vmax.f32 %v297, 0.0
      %v330 = vmax.f32 %v298, 0.0
      %v331 = vmax.f32 %v299, 0.0
      %v332 = vmax.f32 %v300, 0.0
      %v333 = vmax.f32 %v301, 0.0
      %v334 = vmax.f32 %v302, 0.0
      %v335 = vmax.f32 %v303, 0.0
      %v336 = vmax.f32 %v304, 0.0
      %v337 = vmax.f32 %v305, 0.0
      %v338 = vmax.f32 %v306, 0.0
      %v339 = vmax.f32 %v307, 0.0
      %v340 = vmax.f32 %v308, 0.0
      %v341 = vmax.f32 %v309, 0.0
      %v342 = vmax.f32 %v310, 0.0
      %v343 = vmax.f32 %v311, 0.0
      %v344 = vmax.f32 %v312, 0.0
      %v345 = vmax.f32 %v313, 0.0
      %v346 = vmax.f32 %v314, 0.0
      %v347 = vmax.f32 %v315, 0.0
      %v348 = vmax.f32 %v316, 0.0
      %v349 = vmax.f32 %v317, 0.0
      %v350 = vmax.f32 %v318, 0.0
      %v351 = vmax.f32 %v319, 0.0
      %v352 = vmax.f32 %v320, 0.0
      %v353 = vmax.f32 %v321, 0.0
      %v354 = vmax.f32 %v322, 0.0
      %355 = vst [vmem:[%s199] sm:$0xff] %v323
      %356 = vst [vmem:[%s199 + $0x8] sm:$0xff] %v324
      %357 = vst [vmem:[%s199 + $0x10] sm:$0xff] %v325
      %358 = vst [vmem:[%s199 + $0x18] sm:$0xff] %v326
      %359 = vst [vmem:[%s199 + $0x20] sm:$0xff] %v327
      %360 = vst [vmem:[%s199 + $0x28] sm:$0xff] %v328
      %361 = vst [vmem:[%s199 + $0x30] sm:$0xff] %v329
      %362 = vst [vmem:[%s199 + $0x38] sm:$0xff] %v330
      %363 = vst [vmem:[%s199 + $0x40] sm:$0xff] %v331
      %364 = vst [vmem:[%s199 + $0x48] sm:$0xff] %v332
      %365 = vst [vmem:[%s199 + $0x50] sm:$0xff] %v333
      %366 = vst [vmem:[%s199 + $0x58] sm:$0xff] %v334
      %367 = vst [vmem:[%s199 + $0x60] sm:$0xff] %v335
      %368 = vst [vmem:[%s199 + $0x68] sm:$0xff] %v336
      %369 = vst [vmem:[%s199 + $0x70] sm:$0xff] %v337
      %370 = vst [vmem:[%s199 + $0x78] sm:$0xff] %v338
      %371 = vst [vmem:[%s199 + $0x80] sm:$0xff] %v339
      %372 = vst [vmem:[%s199 + $0x88] sm:$0xff] %v340
      %373 = vst [vmem:[%s199 + $0x90] sm:$0xff] %v341
      %374 = vst [vmem:[%s199 + $0x98] sm:$0xff] %v342
      %375 = vst [vmem:[%s199 + $0xa0] sm:$0xff] %v343
      %376 = vst [vmem:[%s199 + $0xa8] sm:$0xff] %v344
      %377 = vst [vmem:[%s199 + $0xb0] sm:$0xff] %v345
      %378 = vst [vmem:[%s199 + $0xb8] sm:$0xff] %v346
      %379 = vst [vmem:[%s199 + $0xc0] sm:$0xff] %v347
      %380 = vst [vmem:[%s199 + $0xc8] sm:$0xff] %v348
      %381 = vst [vmem:[%s199 + $0xd0] sm:$0xff] %v349
      %382 = vst [vmem:[%s199 + $0xd8] sm:$0xff] %v350
      %383 = vst [vmem:[%s199 + $0xe0] sm:$0xff] %v351
      %384 = vst [vmem:[%s199 + $0xe8] sm:$0xff] %v352
      %385 = vst [vmem:[%s199 + $0xf0] sm:$0xff] %v353
      %386 = vst [vmem:[%s199 + $0xf8] sm:$0xff] %v354
      %s387 = smul.u32 32, %s15
      %p388 = scmp.lt.s32.totalorder %s387, 63
      %s389 = scalar_select %p388, %s387, 63
      %s390 = smul.addr %s389, 8
      %s391 = scalar_lea.vmem %s4, %s390
      // Predicated region
      $region37: #{basic_conv.3} parent=35 // pred_check
        %p392 = pneg %p122
      $region38: #{basic_conv.3} parent=35 // pred_check_branch
        %394 = sbr.rel (%p392) target = $region40
      $region39: #{basic_conv.3} parent=35 // pred_region
        %s395 = smul.u32 32, %s15
      $region40: #{basic_conv.3} parent=35 // pred_fallthru
        _
    $region36: #{basic_conv.3} parent=5 // pred_fallthru
      _
    %p396 = scmp.le.s32.totalorder 2, %s10
    // Predicated region
    $region41: #{basic_conv.3} parent=5 // pred_check
      %p397 = pneg %p396
    $region42: #{basic_conv.3} parent=5 // pred_check_branch
      %399 = sbr.rel (%p397) target = $region44
    $region43: #{basic_conv.3} parent=5 // pred_region
      %s400 = ssub.s32 %s10, 2
      // Predicated region
      $region45: #{basic_conv.3} parent=43 // pred_check
        %p401 = pneg %p128
      $region46: #{basic_conv.3} parent=43 // pred_check_branch
        %403 = sbr.rel (%p401) target = $region48
      $region47: #{basic_conv.3} parent=43 // pred_region
        %s404 = smul.u32 32, %s16
        %p405 = scmp.lt.s32.totalorder %s404, 63
        %s406 = scalar_select %p405, %s404, 63
        %s407 = smul.addr %s406, 8
        %s408 = scalar_lea.vmem %s4, %s407
      $region48: #{basic_conv.3} parent=43 // pred_fallthru
        _
    $region44: #{basic_conv.3} parent=5 // pred_fallthru
      _
  $region6: #{basic_conv.3} parent=0 // loop_footer
    %s14 = sadd.s32 1, %s10
  $region7: #{basic_conv.3} parent=0 // loop_footer_branch
    %9 = sbr.rel target = $region3
  $region8: #{basic_conv.3} parent=0 // loop_exit
    _

// kernel: basic_conv.2
$region0: #{basic_conv.2}
  #allocation0 [shape = 'u32[]', space=smem, size = 0x4, offset = 0x4, fixed_abs, tag = 'smem constant byte address 0x4 - core index']
  #allocation1 [shape = 'u32[144,128]{1,0:T(1,128)}', space=vmem, size = 0x12000, scoped, tag = 'internal scratch']
  %s0 = inlined_call_operand.vmem [shape: bf16[512,48], index: 0, kind: input, shape index: {}]
  %s1 = inlined_call_operand.vmem [shape: bf16[48,128], index: 1, kind: input, shape index: {}]
  %s2 = inlined_call_operand.vmem [shape: f32[512,128], index: 2, kind: output, shape index: {0}]
  %s3 = inlined_call_operand.vmem [shape: f32[2,128], index: 3, kind: output, shape index: {1}]
  %4 = xla_tuple %s2, %s3
  %s5 = sld [smem:[#allocation0]]
  $region53: #{basic_conv.2} parent=0
    _
  %s7 = ssub.s32 1, %s5
  %s8 = scalar_select 0, %s7, %s5
  loop: start=0, step=1, limit=4
  $region2: #{basic_conv.2} parent=0 // loop_pre_header
    _
  $region3: #{basic_conv.2} parent=0 // loop_header
    %s10 = sphi 0, %s14
    %p11 = scmp.ge.s32.totalorder %s10, 4
    %s20 = sphi 0, %s22
    %s23 = sphi 0, %s20
    %s24 = sphi 0, %s23
    %s40 = sphi 0, %s24
    %s44 = sphi 0, %s44
    %s46 = sphi 0, %s44
    %s47 = sphi 0, %s46
    %s61 = sphi 0, %s47
    %s67 = sphi 0, %s69
    %s70 = sphi 0, %s67
    %s71 = sphi 0, %s70
    %s87 = sphi 0, %s71
    %s91 = sphi 0, %s91
    %s93 = sphi 0, %s91
    %s94 = sphi 0, %s93
    %s108 = sphi 0, %s94
  $region4: #{basic_conv.2} parent=0 // loop_header_branch
    %13 = sbr.rel (%p11) target = $region8
  $region5: #{basic_conv.2} parent=0 // loop_body
    %s15 = ssub.s32 %s10, 1
    %s16 = ssub.s32 %s10, 2
    %s17 = sadd.s32 %s10, 1
    %s18 = ssub.s32 %s10, %s17
    %p19 = scmp.eq.s32.totalorder %s18, 0
    %s21 = sadd.s32 %s20, 1
    %s22 = scalar_select %p19, %s20, %s21
    %p25 = pneg %p19
    %p26 = scmp.eq.s32.totalorder %s10, 1
    %p27 = por %p25, %p26
    %p28 = scmp.ne.s32.totalorder %s20, %s23
    %p29 = scmp.eq.s32.totalorder %s10, 0
    %p30 = por %p28, %p29
    %p31 = scmp.ne.s32.totalorder %s20, %s23
    %p32 = scmp.eq.s32.totalorder %s15, 1
    %p33 = por %p31, %p32
    %p34 = scmp.ne.s32.totalorder %s23, %s24
    %p35 = scmp.eq.s32.totalorder %s15, 0
    %p36 = por %p34, %p35
    %p37 = scmp.ne.s32.totalorder %s23, %s24
    %p38 = scmp.eq.s32.totalorder %s16, 1
    %p39 = por %p37, %p38
    %p41 = scmp.ne.s32.totalorder %s24, %s40
    %p42 = scmp.eq.s32.totalorder %s16, 0
    %p43 = por %p41, %p42
    %s45 = sadd.s32 %s44, 1
    %p48 = scmp.eq.s32.totalorder %s10, 1
    %p49 = scmp.ne.s32.totalorder %s44, %s46
    %p50 = scmp.eq.s32.totalorder %s10, 0
    %p51 = por %p49, %p50
    %p52 = scmp.ne.s32.totalorder %s44, %s46
    %p53 = scmp.eq.s32.totalorder %s15, 1
    %p54 = por %p52, %p53
    %p55 = scmp.ne.s32.totalorder %s46, %s47
    %p56 = scmp.eq.s32.totalorder %s15, 0
    %p57 = por %p55, %p56
    %p58 = scmp.ne.s32.totalorder %s46, %s47
    %p59 = scmp.eq.s32.totalorder %s16, 1
    %p60 = por %p58, %p59
    %p62 = scmp.ne.s32.totalorder %s47, %s61
    %p63 = scmp.eq.s32.totalorder %s16, 0
    %p64 = por %p62, %p63
    %s65 = ssub.s32 %s10, %s17
    %p66 = scmp.eq.s32.totalorder %s65, 0
    %s68 = sadd.s32 %s67, 1
    %s69 = scalar_select %p66, %s67, %s68
    %p72 = pneg %p66
    %p73 = scmp.eq.s32.totalorder %s10, 1
    %p74 = por %p72, %p73
    %p75 = scmp.ne.s32.totalorder %s67, %s70
    %p76 = scmp.eq.s32.totalorder %s10, 0
    %p77 = por %p75, %p76
    %p78 = scmp.ne.s32.totalorder %s67, %s70
    %p79 = scmp.eq.s32.totalorder %s15, 1
    %p80 = por %p78, %p79
    %p81 = scmp.ne.s32.totalorder %s70, %s71
    %p82 = scmp.eq.s32.totalorder %s15, 0
    %p83 = por %p81, %p82
    %p84 = scmp.ne.s32.totalorder %s70, %s71
    %p85 = scmp.eq.s32.totalorder %s16, 1
    %p86 = por %p84, %p85
    %p88 = scmp.ne.s32.totalorder %s71, %s87
    %p89 = scmp.eq.s32.totalorder %s16, 0
    %p90 = por %p88, %p89
    %s92 = sadd.s32 %s91, 1
    %p95 = scmp.eq.s32.totalorder %s10, 1
    %p96 = scmp.ne.s32.totalorder %s91, %s93
    %p97 = scmp.eq.s32.totalorder %s10, 0
    %p98 = por %p96, %p97
    %p99 = scmp.ne.s32.totalorder %s91, %s93
    %p100 = scmp.eq.s32.totalorder %s15, 1
    %p101 = por %p99, %p100
    %p102 = scmp.ne.s32.totalorder %s93, %s94
    %p103 = scmp.eq.s32.totalorder %s15, 0
    %p104 = por %p102, %p103
    %p105 = scmp.ne.s32.totalorder %s93, %s94
    %p106 = scmp.eq.s32.totalorder %s16, 1
    %p107 = por %p105, %p106
    %p109 = scmp.ne.s32.totalorder %s94, %s108
    %p110 = scmp.eq.s32.totalorder %s16, 0
    %p111 = por %p109, %p110
    %p112 = scmp.le.s32.totalorder 1, %s10
    %p113 = scmp.lt.s32.totalorder %s10, 3
    %p114 = pnand %p112, %p113
    %p115 = pneg %p114
    // Predicated region
    $region9: #{basic_conv.2} parent=5 // pred_check
      _
    $region10: #{basic_conv.2} parent=5 // pred_check_branch
      %117 = sbr.rel (%p114) target = $region12
    $region11: #{basic_conv.2} parent=5 // pred_region
      %s118 = ssub.s32 %s10, 1
      // Predicated region
      $region13: #{basic_conv.2} parent=11 // pred_check
        %p119 = pneg %p57
      $region14: #{basic_conv.2} parent=11 // pred_check_branch
        %121 = sbr.rel (%p119) target = $region16
      $region15: #{basic_conv.2} parent=11 // pred_region
        _
      $region16: #{basic_conv.2} parent=11 // pred_fallthru
        _
    $region12: #{basic_conv.2} parent=5 // pred_fallthru
      _
    %p122 = scmp.lt.s32.totalorder %s10, 2
    // Predicated region
    $region17: #{basic_conv.2} parent=5 // pred_check
      %p123 = pneg %p122
    $region18: #{basic_conv.2} parent=5 // pred_check_branch
      %125 = sbr.rel (%p123) target = $region20
    $region19: #{basic_conv.2} parent=5 // pred_region
      // Predicated region
      $region21: #{basic_conv.2} parent=19 // pred_check
        %p126 = pneg %p30
      $region22: #{basic_conv.2} parent=19 // pred_check_branch
        %128 = sbr.rel (%p126) target = $region24
      $region23: #{basic_conv.2} parent=19 // pred_region
        %s129 = smul.u32 32, %s10
        %p130 = scmp.lt.s32.totalorder %s129, 63
        %s131 = scalar_select %p130, %s129, 63
        %s132 = smul.addr %s131, 4
        %s133 = scalar_lea.vmem %s0, %s132
        %s134 = smul.u32 32, %s10
      $region24: #{basic_conv.2} parent=19 // pred_fallthru
        _
    $region20: #{basic_conv.2} parent=5 // pred_fallthru
      _
    %p135 = scmp.le.s32.totalorder 1, %s10
    %p136 = scmp.lt.s32.totalorder %s10, 3
    %p137 = pnand %p135, %p136
    %p138 = pneg %p137
    // Predicated region
    $region25: #{basic_conv.2} parent=5 // pred_check
      _
    $region26: #{basic_conv.2} parent=5 // pred_check_branch
      %140 = sbr.rel (%p137) target = $region28
    $region27: #{basic_conv.2} parent=5 // pred_region
      %s141 = ssub.s32 %s10, 1
      %s142 = smul.u32 32, %s15
      %p143 = scmp.lt.s32.totalorder %s142, 63
      %s144 = scalar_select %p143, %s142, 63
      %s145 = smul.addr %s144, 4
      %s146 = scalar_lea.vmem %s0, %s145
      %p147 = pneg %p36
      %p148 = pneg %p33
      %p149 = pneg %p57
      %p150 = pneg %p54
      %p151 = pneg %p83
      %p152 = pneg %p80
      %s153 = smul.u32 32, %s15
      %p154 = scmp.lt.s32.totalorder %s153, 63
      %s155 = scalar_select %p154, %s153, 63
      %s156 = smul.addr %s155, 8
      %s157 = scalar_lea.vmem %s2, %s156
      %p158 = pneg %p104
      %p159 = pneg %p101
      %s160 = smul.u32 32, %s15
      %p161 = scmp.lt.s32.totalorder %s160, 63
      %s162 = scalar_select %p161, %s160, 63
      %s163 = smul.addr %s162, 4
      %s164 = scalar_lea.vmem %s0, %s163
      %s165 = smul.u32 32, %s15
      %s166 = smul.u32 32, %s15
      %p167 = scmp.lt.s32.totalorder %s166, 63
      %s168 = scalar_select %p167, %s166, 63
      %s169 = smul.addr %s168, 8
      %s170 = scalar_lea.vmem %s2, %s169
      %s171 = smul.u32 32, %s15
      %v173 = vld [vmem:[%s164] sm:$0xf]
      %v174 = vld [vmem:[%s164 + $0x4] sm:$0xf]
      %v175 = vld [vmem:[%s164 + $0x8] sm:$0xf]
      %v176 = vld [vmem:[%s164 + $0xc] sm:$0xf]
      %v177 = vld [vmem:[%s164 + $0x10] sm:$0xf]
      %v178 = vld [vmem:[%s164 + $0x14] sm:$0xf]
      %v179 = vld [vmem:[%s164 + $0x18] sm:$0xf]
      %v180 = vld [vmem:[%s164 + $0x1c] sm:$0xf]
      %v181 = vld [vmem:[%s164 + $0x20] sm:$0xf]
      %v182 = vld [vmem:[%s164 + $0x24] sm:$0xf]
      %v183 = vld [vmem:[%s164 + $0x28] sm:$0xf]
      %v184 = vld [vmem:[%s164 + $0x2c] sm:$0xf]
      %v185 = vld [vmem:[%s164 + $0x30] sm:$0xf]
      %v186 = vld [vmem:[%s164 + $0x34] sm:$0xf]
      %v187 = vld [vmem:[%s164 + $0x38] sm:$0xf]
      %v188 = vld [vmem:[%s164 + $0x3c] sm:$0xf]
      %v189 = vld [vmem:[%s164 + $0x40] sm:$0xf]
      %v190 = vld [vmem:[%s164 + $0x44] sm:$0xf]
      %v191 = vld [vmem:[%s164 + $0x48] sm:$0xf]
      %v192 = vld [vmem:[%s164 + $0x4c] sm:$0xf]
      %v193 = vld [vmem:[%s164 + $0x50] sm:$0xf]
      %v194 = vld [vmem:[%s164 + $0x54] sm:$0xf]
      %v195 = vld [vmem:[%s164 + $0x58] sm:$0xf]
      %v196 = vld [vmem:[%s164 + $0x5c] sm:$0xf]
      %v197 = vld [vmem:[%s164 + $0x60] sm:$0xf]
      %v198 = vld [vmem:[%s164 + $0x64] sm:$0xf]
      %v199 = vld [vmem:[%s164 + $0x68] sm:$0xf]
      %v200 = vld [vmem:[%s164 + $0x6c] sm:$0xf]
      %v201 = vld [vmem:[%s164 + $0x70] sm:$0xf]
      %v202 = vld [vmem:[%s164 + $0x74] sm:$0xf]
      %v203 = vld [vmem:[%s164 + $0x78] sm:$0xf]
      %v204 = vld [vmem:[%s164 + $0x7c] sm:$0xf]
      %v205 = vld [vmem:[%s1] sm:$0xf]
      %v206 = vld [vmem:[%s1 + $0x4] sm:$0xf]
      %v207 = vld [vmem:[%s1 + $0x8] sm:$0xf]
      %v208 = vld [vmem:[%s1 + $0xc] sm:$0xf]
      %v209 = vld [vmem:[%s1 + $0x10] sm:$0xf]
      %v210 = vld [vmem:[%s1 + $0x14] sm:$0xf]
      %v243 = vunpack.c.l.b16 %v173
      %v244 = vunpack.c.l.b16 %v174
      %v245 = vunpack.c.l.b16 %v175
      %v246 = vunpack.c.l.b16 %v176
      %v247 = vunpack.c.l.b16 %v177
      %v248 = vunpack.c.l.b16 %v178
      %v249 = vunpack.c.l.b16 %v179
      %v250 = vunpack.c.l.b16 %v180
      %v251 = vunpack.c.l.b16 %v181
      %v252 = vunpack.c.l.b16 %v182
      %v253 = vunpack.c.l.b16 %v183
      %v254 = vunpack.c.l.b16 %v184
      %v255 = vunpack.c.l.b16 %v185
      %v256 = vunpack.c.l.b16 %v186
      %v257 = vunpack.c.l.b16 %v187
      %v258 = vunpack.c.l.b16 %v188
      %v259 = vunpack.c.l.b16 %v189
      %v260 = vunpack.c.l.b16 %v190
      %v261 = vunpack.c.l.b16 %v191
      %v262 = vunpack.c.l.b16 %v192
      %v263 = vunpack.c.l.b16 %v193
      %v264 = vunpack.c.l.b16 %v194
      %v265 = vunpack.c.l.b16 %v195
      %v266 = vunpack.c.l.b16 %v196
      %v267 = vunpack.c.l.b16 %v197
      %v268 = vunpack.c.l.b16 %v198
      %v269 = vunpack.c.l.b16 %v199
      %v270 = vunpack.c.l.b16 %v200
      %v271 = vunpack.c.l.b16 %v201
      %v272 = vunpack.c.l.b16 %v202
      %v273 = vunpack.c.l.b16 %v203
      %v274 = vunpack.c.l.b16 %v204
      %v275 = vpack.c.b16 %v244, %v243
      %v276 = vpack.c.b16 %v246, %v245
      %v277 = vpack.c.b16 %v248, %v247
      %v278 = vpack.c.b16 %v250, %v249
      %v279 = vpack.c.b16 %v252, %v251
      %v280 = vpack.c.b16 %v254, %v253
      %v281 = vpack.c.b16 %v256, %v255
      %v282 = vpack.c.b16 %v258, %v257
      %v283 = vpack.c.b16 %v260, %v259
      %v284 = vpack.c.b16 %v262, %v261
      %v285 = vpack.c.b16 %v264, %v263
      %v286 = vpack.c.b16 %v266, %v265
      %v287 = vpack.c.b16 %v268, %v267
      %v288 = vpack.c.b16 %v270, %v269
      %v289 = vpack.c.b16 %v272, %v271
      %v290 = vpack.c.b16 %v274, %v273
      %v297 = vunpack.c.l.b16 %v205
      %v298 = vunpack.c.l.b16 %v206
      %v299 = vunpack.c.l.b16 %v207
      %v300 = vunpack.c.l.b16 %v208
      %v301 = vunpack.c.l.b16 %v209
      %v302 = vunpack.c.l.b16 %v210
      %v303 = vpack.c.b16 %v298, %v297
      %v304 = vpack.c.b16 %v300, %v299
      %v305 = vpack.c.b16 %v302, %v301
      %vm309 = vcmask 392192
      %v311 = vsel %vm309, %v275, 0
      %v314 = vsel %vm309, %v276, 0
      %v317 = vsel %vm309, %v277, 0
      %v320 = vsel %vm309, %v278, 0
      %v323 = vsel %vm309, %v279, 0
      %v326 = vsel %vm309, %v280, 0
      %v329 = vsel %vm309, %v281, 0
      %v332 = vsel %vm309, %v282, 0
      %v335 = vsel %vm309, %v283, 0
      %v338 = vsel %vm309, %v284, 0
      %v341 = vsel %vm309, %v285, 0
      %v344 = vsel %vm309, %v286, 0
      %v347 = vsel %vm309, %v287, 0
      %v350 = vsel %vm309, %v288, 0
      %v353 = vsel %vm309, %v289, 0
      %v356 = vsel %vm309, %v290, 0
      %358 = vmatprep.subr.bf16.mxu0 0
      %359 = vmatpush1.bf16.msra.mxu0 %v303
      %360 = vmatprep.subr.bf16.mxu0 0
      %361 = vmatpush1.bf16.msra.mxu0 %v304
      %362 = vmatprep.subr.bf16.mxu0 0
      %363 = vmatpush1.bf16.msra.mxu0 %v305
      %364 = vmatprep.subr.bf16.mxu0 0
      %365 = vmatpush1.bf16.msra.mxu0 0
      %366 = vmatprep.subr.bf16.mxu0 0
      %367 = vmatpush1.bf16.msra.mxu0 0
      %368 = vmatprep.subr.bf16.mxu0 0
      %369 = vmatpush1.bf16.msra.mxu0 0
      %370 = vmatprep.subr.bf16.mxu0 0
      %371 = vmatpush1.bf16.msra.mxu0 0
      %372 = vmatprep.subr.bf16.mxu0 0
      %373 = vmatpush1.bf16.msra.mxu0 0
      %374 = vmatprep.subr.bf16.mxu0 0
      %375 = vmatpush1.bf16.msra.mxu0 0
      %376 = vmatprep.subr.bf16.mxu0 0
      %377 = vmatpush1.bf16.msra.mxu0 0
      %378 = vmatprep.subr.bf16.mxu0 0
      %379 = vmatpush1.bf16.msra.mxu0 0
      %380 = vmatprep.subr.bf16.mxu0 0
      %381 = vmatpush1.bf16.msra.mxu0 0
      %382 = vmatprep.subr.bf16.mxu0 0
      %383 = vmatpush1.bf16.msra.mxu0 0
      %384 = vmatprep.subr.bf16.mxu0 0
      %385 = vmatpush1.bf16.msra.mxu0 0
      %386 = vmatprep.subr.bf16.mxu0 0
      %387 = vmatpush1.bf16.msra.mxu0 0
      %388 = vmatprep.subr.bf16.mxu0 0
      %389 = vmatpush1.bf16.msra.mxu0 0
      %390 = vmatprep.mubr.bf16.mxu0 0
      %391 = vmatmul.mubr.bf16.gmra.mrb[0].mxu0 %v311
      %v392 = vpop.f32.mrb[0].mxu0
      %v393 = vadd.f32 0.0, %v392
      %v394 = vpop.f32.mrb[0].mxu0
      %v395 = vpop.f32.mrb[0].mxu0
      %v396 = vadd.f32 0.0, %v395
      %v397 = vpop.f32.mrb[0].mxu0
      %398 = vmatprep.mubr.bf16.mxu0 0
      %399 = vmatmul.mubr.bf16.gmra.mrb[0].mxu0 %v314
      %v400 = vpop.f32.mrb[0].mxu0
      %v401 = vadd.f32 0.0, %v400
      %v402 = vpop.f32.mrb[0].mxu0
      %v403 = vpop.f32.mrb[0].mxu0
      %v404 = vadd.f32 0.0, %v403
      %v405 = vpop.f32.mrb[0].mxu0
      %406 = vmatprep.mubr.bf16.mxu0 0
      %407 = vmatmul.mubr.bf16.gmra.mrb[0].mxu0 %v317
      %v408 = vpop.f32.mrb[0].mxu0
      %v409 = vadd.f32 0.0, %v408
      %v410 = vpop.f32.mrb[0].mxu0
      %v411 = vpop.f32.mrb[0].mxu0
      %v412 = vadd.f32 0.0, %v411
      %v413 = vpop.f32.mrb[0].mxu0
      %414 = vmatprep.mubr.bf16.mxu0 0
      %415 = vmatmul.mubr.bf16.gmra.mrb[0].mxu0 %v320
      %v416 = vpop.f32.mrb[0].mxu0
      %v417 = vadd.f32 0.0, %v416
      %v418 = vpop.f32.mrb[0].mxu0
      %v419 = vpop.f32.mrb[0].mxu0
      %v420 = vadd.f32 0.0, %v419
      %v421 = vpop.f32.mrb[0].mxu0
      %422 = vmatprep.mubr.bf16.mxu0 0
      %423 = vmatmul.mubr.bf16.gmra.mrb[0].mxu0 %v323
      %v424 = vpop.f32.mrb[0].mxu0
      %v425 = vadd.f32 0.0, %v424
      %v426 = vpop.f32.mrb[0].mxu0
      %v427 = vpop.f32.mrb[0].mxu0
      %v428 = vadd.f32 0.0, %v427
      %v429 = vpop.f32.mrb[0].mxu0
      %430 = vmatprep.mubr.bf16.mxu0 0
      %431 = vmatmul.mubr.bf16.gmra.mrb[0].mxu0 %v326
      %v432 = vpop.f32.mrb[0].mxu0
      %v433 = vadd.f32 0.0, %v432
      %v434 = vpop.f32.mrb[0].mxu0
      %v435 = vpop.f32.mrb[0].mxu0
      %v436 = vadd.f32 0.0, %v435
      %v437 = vpop.f32.mrb[0].mxu0
      %438 = vmatprep.mubr.bf16.mxu0 0
      %439 = vmatmul.mubr.bf16.gmra.mrb[0].mxu0 %v329
      %v440 = vpop.f32.mrb[0].mxu0
      %v441 = vadd.f32 0.0, %v440
      %v442 = vpop.f32.mrb[0].mxu0
      %v443 = vpop.f32.mrb[0].mxu0
      %v444 = vadd.f32 0.0, %v443
      %v445 = vpop.f32.mrb[0].mxu0
      %446 = vmatprep.mubr.bf16.mxu0 0
      %447 = vmatmul.mubr.bf16.gmra.mrb[0].mxu0 %v332
      %v448 = vpop.f32.mrb[0].mxu0
      %v449 = vadd.f32 0.0, %v448
      %v450 = vpop.f32.mrb[0].mxu0
      %v451 = vpop.f32.mrb[0].mxu0
      %v452 = vadd.f32 0.0, %v451
      %v453 = vpop.f32.mrb[0].mxu0
      %454 = vmatprep.mubr.bf16.mxu0 0
      %455 = vmatmul.mubr.bf16.gmra.mrb[0].mxu0 %v335
      %v456 = vpop.f32.mrb[0].mxu0
      %v457 = vadd.f32 0.0, %v456
      %v458 = vpop.f32.mrb[0].mxu0
      %v459 = vpop.f32.mrb[0].mxu0
      %v460 = vadd.f32 0.0, %v459
      %v461 = vpop.f32.mrb[0].mxu0
      %462 = vmatprep.mubr.bf16.mxu0 0
      %463 = vmatmul.mubr.bf16.gmra.mrb[0].mxu0 %v338
      %v464 = vpop.f32.mrb[0].mxu0
      %v465 = vadd.f32 0.0, %v464
      %v466 = vpop.f32.mrb[0].mxu0
      %v467 = vpop.f32.mrb[0].mxu0
      %v468 = vadd.f32 0.0, %v467
      %v469 = vpop.f32.mrb[0].mxu0
      %470 = vmatprep.mubr.bf16.mxu0 0
      %471 = vmatmul.mubr.bf16.gmra.mrb[0].mxu0 %v341
      %v472 = vpop.f32.mrb[0].mxu0
      %v473 = vadd.f32 0.0, %v472
      %v474 = vpop.f32.mrb[0].mxu0
      %v475 = vpop.f32.mrb[0].mxu0
      %v476 = vadd.f32 0.0, %v475
      %v477 = vpop.f32.mrb[0].mxu0
      %478 = vmatprep.mubr.bf16.mxu0 0
      %479 = vmatmul.mubr.bf16.gmra.mrb[0].mxu0 %v344
      %v480 = vpop.f32.mrb[0].mxu0
      %v481 = vadd.f32 0.0, %v480
      %v482 = vpop.f32.mrb[0].mxu0
      %v483 = vpop.f32.mrb[0].mxu0
      %v484 = vadd.f32 0.0, %v483
      %v485 = vpop.f32.mrb[0].mxu0
      %486 = vmatprep.mubr.bf16.mxu0 0
      %487 = vmatmul.mubr.bf16.gmra.mrb[0].mxu0 %v347
      %v488 = vpop.f32.mrb[0].mxu0
      %v489 = vadd.f32 0.0, %v488
      %v490 = vpop.f32.mrb[0].mxu0
      %v491 = vpop.f32.mrb[0].mxu0
      %v492 = vadd.f32 0.0, %v491
      %v493 = vpop.f32.mrb[0].mxu0
      %494 = vmatprep.mubr.bf16.mxu0 0
      %495 = vmatmul.mubr.bf16.gmra.mrb[0].mxu0 %v350
      %v496 = vpop.f32.mrb[0].mxu0
      %v497 = vadd.f32 0.0, %v496
      %v498 = vpop.f32.mrb[0].mxu0
      %v499 = vpop.f32.mrb[0].mxu0
      %v500 = vadd.f32 0.0, %v499
      %v501 = vpop.f32.mrb[0].mxu0
      %502 = vmatprep.mubr.bf16.mxu0 0
      %503 = vmatmul.mubr.bf16.gmra.mrb[0].mxu0 %v353
      %v504 = vpop.f32.mrb[0].mxu0
      %v505 = vadd.f32 0.0, %v504
      %v506 = vpop.f32.mrb[0].mxu0
      %v507 = vpop.f32.mrb[0].mxu0
      %v508 = vadd.f32 0.0, %v507
      %v509 = vpop.f32.mrb[0].mxu0
      %510 = vmatprep.mubr.bf16.mxu0 0
      %511 = vmatmul.mubr.bf16.gmra.mrb[0].mxu0 %v356
      %v512 = vpop.f32.mrb[0].mxu0
      %v513 = vadd.f32 0.0, %v512
      %v514 = vpop.f32.mrb[0].mxu0
      %v515 = vpop.f32.mrb[0].mxu0
      %v516 = vadd.f32 0.0, %v515
      %v517 = vpop.f32.mrb[0].mxu0
      %518 = vdwg.mxu0
      %519 = vst [vmem:[%s170] sm:$0xff] %v393
      %520 = vst [vmem:[%s170 + $0x8] sm:$0xff] %v396
      %521 = vst [vmem:[%s170 + $0x10] sm:$0xff] %v401
      %522 = vst [vmem:[%s170 + $0x18] sm:$0xff] %v404
      %523 = vst [vmem:[%s170 + $0x20] sm:$0xff] %v409
      %524 = vst [vmem:[%s170 + $0x28] sm:$0xff] %v412
      %525 = vst [vmem:[%s170 + $0x30] sm:$0xff] %v417
      %526 = vst [vmem:[%s170 + $0x38] sm:$0xff] %v420
      %527 = vst [vmem:[%s170 + $0x40] sm:$0xff] %v425
      %528 = vst [vmem:[%s170 + $0x48] sm:$0xff] %v428
      %529 = vst [vmem:[%s170 + $0x50] sm:$0xff] %v433
      %530 = vst [vmem:[%s170 + $0x58] sm:$0xff] %v436
      %531 = vst [vmem:[%s170 + $0x60] sm:$0xff] %v441
      %532 = vst [vmem:[%s170 + $0x68] sm:$0xff] %v444
      %533 = vst [vmem:[%s170 + $0x70] sm:$0xff] %v449
      %534 = vst [vmem:[%s170 + $0x78] sm:$0xff] %v452
      %535 = vst [vmem:[%s170 + $0x80] sm:$0xff] %v457
      %536 = vst [vmem:[%s170 + $0x88] sm:$0xff] %v460
      %537 = vst [vmem:[%s170 + $0x90] sm:$0xff] %v465
      %538 = vst [vmem:[%s170 + $0x98] sm:$0xff] %v468
      %539 = vst [vmem:[%s170 + $0xa0] sm:$0xff] %v473
      %540 = vst [vmem:[%s170 + $0xa8] sm:$0xff] %v476
      %541 = vst [vmem:[%s170 + $0xb0] sm:$0xff] %v481
      %542 = vst [vmem:[%s170 + $0xb8] sm:$0xff] %v484
      %543 = vst [vmem:[%s170 + $0xc0] sm:$0xff] %v489
      %544 = vst [vmem:[%s170 + $0xc8] sm:$0xff] %v492
      %545 = vst [vmem:[%s170 + $0xd0] sm:$0xff] %v497
      %546 = vst [vmem:[%s170 + $0xd8] sm:$0xff] %v500
      %547 = vst [vmem:[%s170 + $0xe0] sm:$0xff] %v505
      %548 = vst [vmem:[%s170 + $0xe8] sm:$0xff] %v508
      %549 = vst [vmem:[%s170 + $0xf0] sm:$0xff] %v513
      %550 = vst [vmem:[%s170 + $0xf8] sm:$0xff] %v516
      %v551 = vlaneseq
      %v552 = vshrl.u32 %v551, 7
      %v553 = vadd.s32 %v552, 8
      %v554 = vadd.s32 %v552, 16
      %v555 = vadd.s32 %v552, 24
      %v556 = vadd.s32 %v552, 32
      %v557 = vadd.s32 %v552, 40
      %v558 = vadd.s32 %v552, 48
      %v559 = vadd.s32 %v552, 56
      %v560 = vadd.s32 %v552, 64
      %v561 = vadd.s32 %v552, 72
      %v562 = vadd.s32 %v552, 80
      %v563 = vadd.s32 %v552, 88
      %v564 = vadd.s32 %v552, 96
      %v565 = vadd.s32 %v552, 104
      %v566 = vadd.s32 %v552, 112
      %v567 = vadd.s32 %v552, 120
      %v568 = vadd.s32 %v552, 128
      %v569 = vadd.s32 %v552, 136
      %v570 = vadd.s32 %v552, 144
      %v571 = vadd.s32 %v552, 152
      %v572 = vadd.s32 %v552, 160
      %v573 = vadd.s32 %v552, 168
      %v574 = vadd.s32 %v552, 176
      %v575 = vadd.s32 %v552, 184
      %v576 = vadd.s32 %v552, 192
      %v577 = vadd.s32 %v552, 200
      %v578 = vadd.s32 %v552, 208
      %v579 = vadd.s32 %v552, 216
      %v580 = vadd.s32 %v552, 224
      %v581 = vadd.s32 %v552, 232
      %v582 = vadd.s32 %v552, 240
      %v583 = vadd.s32 %v552, 248
      %s584 = smul.u32 %s15, 256
      %v585 = vstv %s584
      %v586 = vadd.s32 %v552, %v585
      %v587 = vadd.s32 %v553, %v585
      %v588 = vadd.s32 %v554, %v585
      %v589 = vadd.s32 %v555, %v585
      %v590 = vadd.s32 %v556, %v585
      %v591 = vadd.s32 %v557, %v585
      %v592 = vadd.s32 %v558, %v585
      %v593 = vadd.s32 %v559, %v585
      %v594 = vadd.s32 %v560, %v585
      %v595 = vadd.s32 %v561, %v585
      %v596 = vadd.s32 %v562, %v585
      %v597 = vadd.s32 %v563, %v585
      %v598 = vadd.s32 %v564, %v585
      %v599 = vadd.s32 %v565, %v585
      %v600 = vadd.s32 %v566, %v585
      %v601 = vadd.s32 %v567, %v585
      %v602 = vadd.s32 %v568, %v585
      %v603 = vadd.s32 %v569, %v585
      %v604 = vadd.s32 %v570, %v585
      %v605 = vadd.s32 %v571, %v585
      %v606 = vadd.s32 %v572, %v585
      %v607 = vadd.s32 %v573, %v585
      %v608 = vadd.s32 %v574, %v585
      %v609 = vadd.s32 %v575, %v585
      %v610 = vadd.s32 %v576, %v585
      %v611 = vadd.s32 %v577, %v585
      %v612 = vadd.s32 %v578, %v585
      %v613 = vadd.s32 %v579, %v585
      %v614 = vadd.s32 %v580, %v585
      %v615 = vadd.s32 %v581, %v585
      %v616 = vadd.s32 %v582, %v585
      %v617 = vadd.s32 %v583, %v585
      %vm618 = vcmp.lt.s32.totalorder %v586, 512
      %vm619 = vcmp.lt.s32.totalorder %v587, 512
      %vm620 = vcmp.lt.s32.totalorder %v588, 512
      %vm621 = vcmp.lt.s32.totalorder %v589, 512
      %vm622 = vcmp.lt.s32.totalorder %v590, 512
      %vm623 = vcmp.lt.s32.totalorder %v591, 512
      %vm624 = vcmp.lt.s32.totalorder %v592, 512
      %vm625 = vcmp.lt.s32.totalorder %v593, 512
      %vm626 = vcmp.lt.s32.totalorder %v594, 512
      %vm627 = vcmp.lt.s32.totalorder %v595, 512
      %vm628 = vcmp.lt.s32.totalorder %v596, 512
      %vm629 = vcmp.lt.s32.totalorder %v597, 512
      %vm630 = vcmp.lt.s32.totalorder %v598, 512
      %vm631 = vcmp.lt.s32.totalorder %v599, 512
      %vm632 = vcmp.lt.s32.totalorder %v600, 512
      %vm633 = vcmp.lt.s32.totalorder %v601, 512
      %vm634 = vcmp.lt.s32.totalorder %v602, 512
      %vm635 = vcmp.lt.s32.totalorder %v603, 512
      %vm636 = vcmp.lt.s32.totalorder %v604, 512
      %vm637 = vcmp.lt.s32.totalorder %v605, 512
      %vm638 = vcmp.lt.s32.totalorder %v606, 512
      %vm639 = vcmp.lt.s32.totalorder %v607, 512
      %vm640 = vcmp.lt.s32.totalorder %v608, 512
      %vm641 = vcmp.lt.s32.totalorder %v609, 512
      %vm642 = vcmp.lt.s32.totalorder %v610, 512
      %vm643 = vcmp.lt.s32.totalorder %v611, 512
      %vm644 = vcmp.lt.s32.totalorder %v612, 512
      %vm645 = vcmp.lt.s32.totalorder %v613, 512
      %vm646 = vcmp.lt.s32.totalorder %v614, 512
      %vm647 = vcmp.lt.s32.totalorder %v615, 512
      %vm648 = vcmp.lt.s32.totalorder %v616, 512
      %vm649 = vcmp.lt.s32.totalorder %v617, 512
      %v650 = vsel %vm618, 1, 0
      %v651 = vsel %vm619, 1, 0
      %v652 = vsel %vm620, 1, 0
      %v653 = vsel %vm621, 1, 0
      %v654 = vsel %vm622, 1, 0
      %v655 = vsel %vm623, 1, 0
      %v656 = vsel %vm624, 1, 0
      %v657 = vsel %vm625, 1, 0
      %v658 = vsel %vm626, 1, 0
      %v659 = vsel %vm627, 1, 0
      %v660 = vsel %vm628, 1, 0
      %v661 = vsel %vm629, 1, 0
      %v662 = vsel %vm630, 1, 0
      %v663 = vsel %vm631, 1, 0
      %v664 = vsel %vm632, 1, 0
      %v665 = vsel %vm633, 1, 0
      %v666 = vsel %vm634, 1, 0
      %v667 = vsel %vm635, 1, 0
      %v668 = vsel %vm636, 1, 0
      %v669 = vsel %vm637, 1, 0
      %v670 = vsel %vm638, 1, 0
      %v671 = vsel %vm639, 1, 0
      %v672 = vsel %vm640, 1, 0
      %v673 = vsel %vm641, 1, 0
      %v674 = vsel %vm642, 1, 0
      %v675 = vsel %vm643, 1, 0
      %v676 = vsel %vm644, 1, 0
      %v677 = vsel %vm645, 1, 0
      %v678 = vsel %vm646, 1, 0
      %v679 = vsel %vm647, 1, 0
      %v680 = vsel %vm648, 1, 0
      %v681 = vsel %vm649, 1, 0
      %vm682 = vcmp.eq.s32.totalorder %v650, 1
      %vm683 = vcmp.eq.s32.totalorder %v651, 1
      %vm684 = vcmp.eq.s32.totalorder %v652, 1
      %vm685 = vcmp.eq.s32.totalorder %v653, 1
      %vm686 = vcmp.eq.s32.totalorder %v654, 1
      %vm687 = vcmp.eq.s32.totalorder %v655, 1
      %vm688 = vcmp.eq.s32.totalorder %v656, 1
      %vm689 = vcmp.eq.s32.totalorder %v657, 1
      %vm690 = vcmp.eq.s32.totalorder %v658, 1
      %vm691 = vcmp.eq.s32.totalorder %v659, 1
      %vm692 = vcmp.eq.s32.totalorder %v660, 1
      %vm693 = vcmp.eq.s32.totalorder %v661, 1
      %vm694 = vcmp.eq.s32.totalorder %v662, 1
      %vm695 = vcmp.eq.s32.totalorder %v663, 1
      %vm696 = vcmp.eq.s32.totalorder %v664, 1
      %vm697 = vcmp.eq.s32.totalorder %v665, 1
      %vm698 = vcmp.eq.s32.totalorder %v666, 1
      %vm699 = vcmp.eq.s32.totalorder %v667, 1
      %vm700 = vcmp.eq.s32.totalorder %v668, 1
      %vm701 = vcmp.eq.s32.totalorder %v669, 1
      %vm702 = vcmp.eq.s32.totalorder %v670, 1
      %vm703 = vcmp.eq.s32.totalorder %v671, 1
      %vm704 = vcmp.eq.s32.totalorder %v672, 1
      %vm705 = vcmp.eq.s32.totalorder %v673, 1
      %vm706 = vcmp.eq.s32.totalorder %v674, 1
      %vm707 = vcmp.eq.s32.totalorder %v675, 1
      %vm708 = vcmp.eq.s32.totalorder %v676, 1
      %vm709 = vcmp.eq.s32.totalorder %v677, 1
      %vm710 = vcmp.eq.s32.totalorder %v678, 1
      %vm711 = vcmp.eq.s32.totalorder %v679, 1
      %vm712 = vcmp.eq.s32.totalorder %v680, 1
      %vm713 = vcmp.eq.s32.totalorder %v681, 1
      %v714 = vsel %vm682, %v393, 0.0
      %v715 = vsel %vm683, %v396, 0.0
      %v716 = vsel %vm684, %v401, 0.0
      %v717 = vsel %vm685, %v404, 0.0
      %v718 = vsel %vm686, %v409, 0.0
      %v719 = vsel %vm687, %v412, 0.0
      %v720 = vsel %vm688, %v417, 0.0
      %v721 = vsel %vm689, %v420, 0.0
      %v722 = vsel %vm690, %v425, 0.0
      %v723 = vsel %vm691, %v428, 0.0
      %v724 = vsel %vm692, %v433, 0.0
      %v725 = vsel %vm693, %v436, 0.0
      %v726 = vsel %vm694, %v441, 0.0
      %v727 = vsel %vm695, %v444, 0.0
      %v728 = vsel %vm696, %v449, 0.0
      %v729 = vsel %vm697, %v452, 0.0
      %v730 = vsel %vm698, %v457, 0.0
      %v731 = vsel %vm699, %v460, 0.0
      %v732 = vsel %vm700, %v465, 0.0
      %v733 = vsel %vm701, %v468, 0.0
      %v734 = vsel %vm702, %v473, 0.0
      %v735 = vsel %vm703, %v476, 0.0
      %v736 = vsel %vm704, %v481, 0.0
      %v737 = vsel %vm705, %v484, 0.0
      %v738 = vsel %vm706, %v489, 0.0
      %v739 = vsel %vm707, %v492, 0.0
      %v740 = vsel %vm708, %v497, 0.0
      %v741 = vsel %vm709, %v500, 0.0
      %v742 = vsel %vm710, %v505, 0.0
      %v743 = vsel %vm711, %v508, 0.0
      %v744 = vsel %vm712, %v513, 0.0
      %v745 = vsel %vm713, %v516, 0.0
      %p746 = scmp.eq.s32.totalorder %s15, 0
      // Predicated region
      $region29: #{basic_conv.2} parent=27 // pred_check
        %p747 = pneg %p746
      $region30: #{basic_conv.2} parent=27 // pred_check_branch
        %749 = sbr.rel (%p747) target = $region32
      $region31: #{basic_conv.2} parent=27 // pred_region
        %750 = vst [vmem:[%s3] sm:$0x3] 0.0
      $region32: #{basic_conv.2} parent=27 // pred_fallthru
        _
      %v751 = vadd.f32 %v714, %v715
      %v752 = vadd.f32 %v751, %v716
      %v753 = vadd.f32 %v752, %v717
      %v754 = vadd.f32 %v753, %v718
      %v755 = vadd.f32 %v754, %v719
      %v756 = vadd.f32 %v755, %v720
      %v757 = vadd.f32 %v756, %v721
      %v758 = vadd.f32 %v757, %v722
      %v759 = vadd.f32 %v758, %v723
      %v760 = vadd.f32 %v759, %v724
      %v761 = vadd.f32 %v760, %v725
      %v762 = vadd.f32 %v761, %v726
      %v763 = vadd.f32 %v762, %v727
      %v764 = vadd.f32 %v763, %v728
      %v765 = vadd.f32 %v764, %v729
      %v766 = vadd.f32 %v765, %v730
      %v767 = vadd.f32 %v766, %v731
      %v768 = vadd.f32 %v767, %v732
      %v769 = vadd.f32 %v768, %v733
      %v770 = vadd.f32 %v769, %v734
      %v771 = vadd.f32 %v770, %v735
      %v772 = vadd.f32 %v771, %v736
      %v773 = vadd.f32 %v772, %v737
      %v774 = vadd.f32 %v773, %v738
      %v775 = vadd.f32 %v774, %v739
      %v776 = vadd.f32 %v775, %v740
      %v777 = vadd.f32 %v776, %v741
      %v778 = vadd.f32 %v777, %v742
      %v779 = vadd.f32 %v778, %v743
      %v780 = vadd.f32 %v779, %v744
      %v781 = vadd.f32 %v780, %v745
      %v782 = vrot.slane %v781, 4
      %v783 = vadd.f32 %v781, %v782
      %v784 = vrot.slane %v783, 2
      %v785 = vadd.f32 %v783, %v784
      %v786 = vrot.slane %v785, 1
      %v787 = vadd.f32 %v785, %v786
      %v788 = vmul.f32 %v714, %v714
      %v789 = vmul.f32 %v715, %v715
      %v790 = vmul.f32 %v716, %v716
      %v791 = vmul.f32 %v717, %v717
      %v792 = vmul.f32 %v718, %v718
      %v793 = vmul.f32 %v719, %v719
      %v794 = vmul.f32 %v720, %v720
      %v795 = vmul.f32 %v721, %v721
      %v796 = vmul.f32 %v722, %v722
      %v797 = vmul.f32 %v723, %v723
      %v798 = vmul.f32 %v724, %v724
      %v799 = vmul.f32 %v725, %v725
      %v800 = vmul.f32 %v726, %v726
      %v801 = vmul.f32 %v727, %v727
      %v802 = vmul.f32 %v728, %v728
      %v803 = vmul.f32 %v729, %v729
      %v804 = vmul.f32 %v730, %v730
      %v805 = vmul.f32 %v731, %v731
      %v806 = vmul.f32 %v732, %v732
      %v807 = vmul.f32 %v733, %v733
      %v808 = vmul.f32 %v734, %v734
      %v809 = vmul.f32 %v735, %v735
      %v810 = vmul.f32 %v736, %v736
      %v811 = vmul.f32 %v737, %v737
      %v812 = vmul.f32 %v738, %v738
      %v813 = vmul.f32 %v739, %v739
      %v814 = vmul.f32 %v740, %v740
      %v815 = vmul.f32 %v741, %v741
      %v816 = vmul.f32 %v742, %v742
      %v817 = vmul.f32 %v743, %v743
      %v818 = vmul.f32 %v744, %v744
      %v819 = vmul.f32 %v745, %v745
      %v820 = vadd.f32 %v788, %v789
      %v821 = vadd.f32 %v820, %v790
      %v822 = vadd.f32 %v821, %v791
      %v823 = vadd.f32 %v822, %v792
      %v824 = vadd.f32 %v823, %v793
      %v825 = vadd.f32 %v824, %v794
      %v826 = vadd.f32 %v825, %v795
      %v827 = vadd.f32 %v826, %v796
      %v828 = vadd.f32 %v827, %v797
      %v829 = vadd.f32 %v828, %v798
      %v830 = vadd.f32 %v829, %v799
      %v831 = vadd.f32 %v830, %v800
      %v832 = vadd.f32 %v831, %v801
      %v833 = vadd.f32 %v832, %v802
      %v834 = vadd.f32 %v833, %v803
      %v835 = vadd.f32 %v834, %v804
      %v836 = vadd.f32 %v835, %v805
      %v837 = vadd.f32 %v836, %v806
      %v838 = vadd.f32 %v837, %v807
      %v839 = vadd.f32 %v838, %v808
      %v840 = vadd.f32 %v839, %v809
      %v841 = vadd.f32 %v840, %v810
      %v842 = vadd.f32 %v841, %v811
      %v843 = vadd.f32 %v842, %v812
      %v844 = vadd.f32 %v843, %v813
      %v845 = vadd.f32 %v844, %v814
      %v846 = vadd.f32 %v845, %v815
      %v847 = vadd.f32 %v846, %v816
      %v848 = vadd.f32 %v847, %v817
      %v849 = vadd.f32 %v848, %v818
      %v850 = vadd.f32 %v849, %v819
      %v851 = vrot.slane %v850, 4
      %v852 = vadd.f32 %v850, %v851
      %v853 = vrot.slane %v852, 2
      %v854 = vadd.f32 %v852, %v853
      %v855 = vrot.slane %v854, 1
      %v856 = vadd.f32 %v854, %v855
      %v857 = vld [vmem:[%s3] sm:$0x3]
      %vm858 = vcmask 1040384
      %v859 = vsel %vm858, %v787, %v856
      %v860 = vadd.f32 %v857, %v859
      %861 = vst [vmem:[%s3] sm:$0x3] %v860
      %s862 = smul.u32 32, %s15
      %p863 = scmp.lt.s32.totalorder %s862, 63
      %s864 = scalar_select %p863, %s862, 63
      %s865 = smul.addr %s864, 8
      %s866 = scalar_lea.vmem %s2, %s865
      // Predicated region
      $region33: #{basic_conv.2} parent=27 // pred_check
        %p867 = pneg %p80
      $region34: #{basic_conv.2} parent=27 // pred_check_branch
        %869 = sbr.rel (%p867) target = $region36
      $region35: #{basic_conv.2} parent=27 // pred_region
        %s870 = smul.u32 32, %s15
      $region36: #{basic_conv.2} parent=27 // pred_fallthru
        _
      // Predicated region
      $region37: #{basic_conv.2} parent=27 // pred_check
        %p871 = pneg %p101
      $region38: #{basic_conv.2} parent=27 // pred_check_branch
        %873 = sbr.rel (%p871) target = $region40
      $region39: #{basic_conv.2} parent=27 // pred_region
        _
      $region40: #{basic_conv.2} parent=27 // pred_fallthru
        _
      // Predicated region
      $region41: #{basic_conv.2} parent=27 // pred_check
        %p874 = pneg %p101
      $region42: #{basic_conv.2} parent=27 // pred_check_branch
        %876 = sbr.rel (%p874) target = $region44
      $region43: #{basic_conv.2} parent=27 // pred_region
        _
      $region44: #{basic_conv.2} parent=27 // pred_fallthru
        _
    $region28: #{basic_conv.2} parent=5 // pred_fallthru
      _
    %p877 = scmp.le.s32.totalorder 2, %s10
    // Predicated region
    $region45: #{basic_conv.2} parent=5 // pred_check
      %p878 = pneg %p877
    $region46: #{basic_conv.2} parent=5 // pred_check_branch
      %880 = sbr.rel (%p878) target = $region48
    $region47: #{basic_conv.2} parent=5 // pred_region
      %s881 = ssub.s32 %s10, 2
      // Predicated region
      $region49: #{basic_conv.2} parent=47 // pred_check
        %p882 = pneg %p86
      $region50: #{basic_conv.2} parent=47 // pred_check_branch
        %884 = sbr.rel (%p882) target = $region52
      $region51: #{basic_conv.2} parent=47 // pred_region
        %s885 = smul.u32 32, %s16
        %p886 = scmp.lt.s32.totalorder %s885, 63
        %s887 = scalar_select %p886, %s885, 63
        %s888 = smul.addr %s887, 8
        %s889 = scalar_lea.vmem %s2, %s888
      $region52: #{basic_conv.2} parent=47 // pred_fallthru
        _
    $region48: #{basic_conv.2} parent=5 // pred_fallthru
      _
  $region6: #{basic_conv.2} parent=0 // loop_footer
    %s14 = sadd.s32 1, %s10
  $region7: #{basic_conv.2} parent=0 // loop_footer_branch
    %9 = sbr.rel target = $region3
  $region8: #{basic_conv.2} parent=0 // loop_exit
    _

</llo_original>
